<compile_context>
chip_gen: v5e
topology: v5e:2x2
jax: 0.10.0
libtpu: 0.0.40
codegen_flags: <defaults>
</compile_context>

<pallas_src>
import functools

import jax
import jax.numpy as jnp
from jax.experimental import pallas as pl
from jax.experimental.pallas import tpu as pltpu


# ---------------------------------------------------------------------------
# Kernels
# ---------------------------------------------------------------------------

def _crop_hw_kernel(x_ref, o_ref, *, top, left, out_h, out_w):
    # x_ref: (nblk, H, W)      o_ref: (nblk, out_h, out_w)
    # Static slice of the VMEM tile; the copy itself is the whole op.
    o_ref[...] = x_ref[:, top:top + out_h, left:left + out_w]


def _crop_rows_kernel(x_ref, o_ref, *, start, size):
    # x_ref: (nblk, H*W)       o_ref: (nblk, out_h*W)
    # Height-only crop: one contiguous, lane-dense slice per fused (b, c) row.
    o_ref[...] = x_ref[:, start:start + size]


# ---------------------------------------------------------------------------
# Block-size selection
# ---------------------------------------------------------------------------

# Total bytes allowed for the double-buffered in+out blocks of one grid step.
# Conservative so it also fits v5e's 16 MiB / v7x's 32 MiB default scoped VMEM.
_VMEM_BLOCK_BUDGET = 8 * 1024 * 1024


def _pick_block_rows(n, per_row_bytes, budget_bytes, row_ok=None,
                     prefer_split=True):
    """Largest divisor of `n` whose block fits the VMEM budget.

    `row_ok` is an optional extra predicate (used to honour the (8, 128)
    sublane rule for 2-D blocks).  Prefers leaving >= 2 grid steps so v7x's
    two TensorCores both get work.  Returns None if nothing qualifies.
    """
    divisors = [d for d in range(1, n + 1) if n % d == 0]
    ok = [d for d in divisors
          if (row_ok is None or row_ok(d)) and d * per_row_bytes <= budget_bytes]
    if not ok:
        return None
    ok.sort(reverse=True)
    if prefer_split and n >= 2:
        split = [d for d in ok if d <= n // 2]
        if split:
            return split[0]
    return ok[0]


# ---------------------------------------------------------------------------
# Wrapper
# ---------------------------------------------------------------------------

def crop2d(x: jax.Array, crop) -> jax.Array:
    """Crop input using slicing. Assumes NCHW (BCHW) data.

    crop = (left, right, top, bottom), same semantics as the PyTorch Crop2d.
    """
    assert len(crop) == 4
    left, right, top, bottom = (int(c) for c in crop)
    B, C, H, W = x.shape
    out_h = H - top - bottom
    out_w = W - left - right
    assert out_h > 0 and out_w > 0, "crop removes entire spatial extent"

    N = B * C
    isz = jnp.dtype(x.dtype).itemsize
    cost = pl.CostEstimate(
        flops=0,
        transcendentals=0,
        bytes_accessed=(N * H * W + N * out_h * out_w) * isz,
    )

    # ------------------------------------------------------------------
    # Fast path: height-only crop.  Flatten spatial so the crop is a single
    # contiguous slice per fused (b, c) row and the output last (lane) dim is
    # out_h*W -> wide, unmasked vector stores instead of masked partial ones.
    # ------------------------------------------------------------------
    if left == 0 and right == 0:
        per_row = 2 * (H * W + out_h * W) * isz  # double-buffered in + out
        nblk = _pick_block_rows(
            N, per_row, _VMEM_BLOCK_BUDGET,
            # 2-D blocks: second-to-last dim must be a multiple of 8 or span
            # the full array extent.
            row_ok=lambda d: (d % 8 == 0) or (d == N),
        )
        if nblk is not None:
            x2 = x.reshape(N, H * W)
            kernel = functools.partial(
                _crop_rows_kernel, start=top * W, size=out_h * W)
            out2 = pl.pallas_call(
                kernel,
                out_shape=jax.ShapeDtypeStruct((N, out_h * W), x.dtype),
                grid=(N // nblk,),
                in_specs=[pl.BlockSpec((nblk, H * W), lambda i: (i, 0))],
                out_specs=pl.BlockSpec((nblk, out_h * W), lambda i: (i, 0)),
                compiler_params=pltpu.CompilerParams(
                    dimension_semantics=("parallel",)),
                cost_estimate=cost,
            )(x2)
            return out2.reshape(B, C, out_h, W)

    # ------------------------------------------------------------------
    # General path: fuse (B, C) into one leading axis and move `nblk` full
    # (H, W) planes per grid step; the crop is a static slice of the VMEM
    # tile.  Last two block dims equal the full array dims, so the (8, 128)
    # rule never bites regardless of crop amounts.
    # ------------------------------------------------------------------
    per_row = 2 * (H * W + out_h * out_w) * isz  # double-buffered in + out
    nblk = _pick_block_rows(N, per_row, _VMEM_BLOCK_BUDGET)
    if nblk is None:
        nblk = 1  # single (H, W) plane per step; smallest possible block

    x3 = x.reshape(N, H, W)
    kernel = functools.partial(
        _crop_hw_kernel, top=top, left=left, out_h=out_h, out_w=out_w)
    out3 = pl.pallas_call(
        kernel,
        out_shape=jax.ShapeDtypeStruct((N, out_h, out_w), x.dtype),
        grid=(N // nblk,),
        in_specs=[pl.BlockSpec((nblk, H, W), lambda i: (i, 0, 0))],
        out_specs=pl.BlockSpec((nblk, out_h, out_w), lambda i: (i, 0, 0)),
        compiler_params=pltpu.CompilerParams(
            dimension_semantics=("parallel",)),
        cost_estimate=cost,
    )(x3)
    return out3.reshape(B, C, out_h, out_w)


# ---------------------------------------------------------------------------
# Self-test
# ---------------------------------------------------------------------------

if __name__ == "__main__":
    key = jax.random.PRNGKey(0)
    x = jax.random.normal(key, (2, 4, 16, 16), dtype=jnp.float32)

    # General crop (exercises the (N, H, W) sliced-copy path).
    crop = (1, 2, 3, 1)  # (left, right, top, bottom)
    out = crop2d(x, crop)
    jax.block_until_ready(out)
    l, r, t, b = crop
    ref = x[:, :, t:x.shape[-2] - b, l:x.shape[-1] - r]
    assert out.shape == ref.shape, (out.shape, ref.shape)
    assert jnp.array_equal(out, ref), "mismatch vs reference slice (general)"

    # Height-only crop (exercises the lane-dense flattened fast path).
    crop_h = (0, 0, 3, 1)
    out_h_only = crop2d(x, crop_h)
    jax.block_until_ready(out_h_only)
    ref_h = x[:, :, 3:x.shape[-2] - 1, :]
    assert out_h_only.shape == ref_h.shape, (out_h_only.shape, ref_h.shape)
    assert jnp.array_equal(out_h_only, ref_h), "mismatch vs reference (H-only)"

    print("KERNEL_OK")
</pallas_src>

<mosaic_0001>
module attributes {stable_mosaic.version = 11 : i64} {
  func.func @_crop_hw_kernel(%arg0: i32, %arg1: memref<4x16x16xf32, #tpu.memory_space<vmem>>, %arg2: memref<4x12x13xf32, #tpu.memory_space<vmem>>) attributes {dimension_semantics = [#tpu.dimension_semantics<parallel>], iteration_bounds = array<i64: 2>, scalar_prefetch = 0 : i64, scratch_operands = 0 : i64, tpu.core_type = #tpu.core_type<tc>, window_params = [{transform_indices = @transform_0, window_bounds = array<i64: 4, 16, 16>}, {transform_indices = @transform_1, window_bounds = array<i64: 4, 12, 13>}]} {
    %c0 = arith.constant 0 : index
    %c3 = arith.constant 3 : index
    %c1 = arith.constant 1 : index
    %0 = vector.load %arg1[%c0, %c3, %c1] : memref<4x16x16xf32, #tpu.memory_space<vmem>>, vector<4x12x13xf32>
    %c0_0 = arith.constant 0 : index
    %c0_1 = arith.constant 0 : index
    %c0_2 = arith.constant 0 : index
    %1 = vector.load %arg2[%c0_0, %c0_1, %c0_2] : memref<4x12x13xf32, #tpu.memory_space<vmem>>, vector<4x12x13xf32>
    tpu.vector_store %arg2[%c0_0, %c0_1, %c0_2], %0 {strides = array<i32>} : memref<4x12x13xf32, #tpu.memory_space<vmem>>, vector<4x12x13xf32>,
    return
  }
  func.func @transform_0(%arg0: i32) -> (i32, i32, i32) {
    %c0_i32 = arith.constant 0 : i32
    %c0_i32_0 = arith.constant 0 : i32
    %c0_i32_1 = arith.constant 0 : i32
    return %arg0, %c0_i32, %c0_i32_0 : i32, i32, i32
  }
  func.func @transform_1(%arg0: i32) -> (i32, i32, i32) {
    %c0_i32 = arith.constant 0 : i32
    %c0_i32_0 = arith.constant 0 : i32
    %c0_i32_1 = arith.constant 0 : i32
    return %arg0, %c0_i32, %c0_i32_0 : i32, i32, i32
  }
}

</mosaic_0001>

<llo_original>
// kernel: tpu_custom_call.1
$region0: #{tpu_custom_call.1}
  #allocation0 [shape = 'u32[]', space=smem, size = 0x4, offset = 0x4, fixed_abs, tag = 'smem constant byte address 0x4 - core index']
  #allocation1 [shape = 'u32[72,128]{1,0:T(1,128)}', space=vmem, size = 0x9000, scoped, tag = 'internal scratch']
  %s0 = inlined_call_operand.hbm [shape: f32[8,16,16], index: 0, kind: input, shape index: {}]
  %s1 = inlined_call_operand.vmem [shape: f32[8,12,13], index: 1, kind: output, shape index: {}]
  %s2 = sld [smem:[#allocation0]]
  $region41: #{tpu_custom_call.1} parent=0
    _
  %s4 = ssub.s32 1, %s2
  %s5 = scalar_select 0, %s4, %s2
  $region1: #{tpu_custom_call.1} parent=0
    #allocation2 [shape = 'u8[65536]{0}', space=vmem, size = 0x10000, scoped, tag = 'input window, operand 0']
    #allocation3 [shape = 's32[2]{0}', space=sflag, size = 0x8, scoped, tag = 'scoped memory for tpu_custom_call.1']
    %6 = vsyncpa [#allocation3], 0
    %s7 = scalar_lea.sflag [#allocation3], 1
    %8 = vsyncpa %s7, 0
    loop: start=0, step=1, limit=4
    $region2: #{tpu_custom_call.1} parent=1 // loop_pre_header
      _
    $region3: #{tpu_custom_call.1} parent=1 // loop_header
      %s10 = sphi 0, %s14
      %p11 = scmp.ge.s32.totalorder %s10, 4
      %s20 = sphi 0, %s22
      %s23 = sphi 0, %s20
      %s24 = sphi 0, %s23
      %s40 = sphi 0, %s24
      %s46 = sphi 0, %s48
      %s49 = sphi 0, %s46
      %s50 = sphi 0, %s49
      %s66 = sphi 0, %s50
    $region4: #{tpu_custom_call.1} parent=1 // loop_header_branch
      %13 = sbr.rel (%p11) target = $region8
    $region5: #{tpu_custom_call.1} parent=1 // loop_body
      %s15 = ssub.s32 %s10, 1
      %s16 = ssub.s32 %s10, 2
      %s17 = sadd.s32 %s10, 1
      %s18 = ssub.s32 %s10, %s17
      %p19 = scmp.eq.s32.totalorder %s18, 0
      %s21 = sadd.s32 %s20, 1
      %s22 = scalar_select %p19, %s20, %s21
      %p25 = pneg %p19
      %p26 = scmp.eq.s32.totalorder %s10, 1
      %p27 = por %p25, %p26
      %p28 = scmp.ne.s32.totalorder %s20, %s23
      %p29 = scmp.eq.s32.totalorder %s10, 0
      %p30 = por %p28, %p29
      %p31 = scmp.ne.s32.totalorder %s20, %s23
      %p32 = scmp.eq.s32.totalorder %s15, 1
      %p33 = por %p31, %p32
      %p34 = scmp.ne.s32.totalorder %s23, %s24
      %p35 = scmp.eq.s32.totalorder %s15, 0
      %p36 = por %p34, %p35
      %p37 = scmp.ne.s32.totalorder %s23, %s24
      %p38 = scmp.eq.s32.totalorder %s16, 1
      %p39 = por %p37, %p38
      %p41 = scmp.ne.s32.totalorder %s24, %s40
      %p42 = scmp.eq.s32.totalorder %s16, 0
      %p43 = por %p41, %p42
      %s44 = ssub.s32 %s10, %s17
      %p45 = scmp.eq.s32.totalorder %s44, 0
      %s47 = sadd.s32 %s46, 1
      %s48 = scalar_select %p45, %s46, %s47
      %p51 = pneg %p45
      %p52 = scmp.eq.s32.totalorder %s10, 1
      %p53 = por %p51, %p52
      %p54 = scmp.ne.s32.totalorder %s46, %s49
      %p55 = scmp.eq.s32.totalorder %s10, 0
      %p56 = por %p54, %p55
      %p57 = scmp.ne.s32.totalorder %s46, %s49
      %p58 = scmp.eq.s32.totalorder %s15, 1
      %p59 = por %p57, %p58
      %p60 = scmp.ne.s32.totalorder %s49, %s50
      %p61 = scmp.eq.s32.totalorder %s15, 0
      %p62 = por %p60, %p61
      %p63 = scmp.ne.s32.totalorder %s49, %s50
      %p64 = scmp.eq.s32.totalorder %s16, 1
      %p65 = por %p63, %p64
      %p67 = scmp.ne.s32.totalorder %s50, %s66
      %p68 = scmp.eq.s32.totalorder %s16, 0
      %p69 = por %p67, %p68
      %p70 = scmp.le.s32.totalorder 1, %s10
      %p71 = scmp.lt.s32.totalorder %s10, 3
      %p72 = pnand %p70, %p71
      %p73 = pneg %p72
      // Predicated region
      $region9: #{tpu_custom_call.1} parent=5 // pred_check
        _
      $region10: #{tpu_custom_call.1} parent=5 // pred_check_branch
        %75 = sbr.rel (%p72) target = $region12
      $region11: #{tpu_custom_call.1} parent=5 // pred_region
        %s76 = ssub.s32 %s10, 1
      $region12: #{tpu_custom_call.1} parent=5 // pred_fallthru
        _
      %p77 = scmp.lt.s32.totalorder %s10, 2
      // Predicated region
      $region13: #{tpu_custom_call.1} parent=5 // pred_check
        %p78 = pneg %p77
      $region14: #{tpu_custom_call.1} parent=5 // pred_check_branch
        %80 = sbr.rel (%p78) target = $region16
      $region15: #{tpu_custom_call.1} parent=5 // pred_region
        // Predicated region
        $region17: #{tpu_custom_call.1} parent=15 // pred_check
          %p81 = pneg %p30
        $region18: #{tpu_custom_call.1} parent=15 // pred_check_branch
          %83 = sbr.rel (%p81) target = $region20
        $region19: #{tpu_custom_call.1} parent=15 // pred_region
          %s84 = sand.u32 %s20, 1
          %s85 = scalar_lea.sflag [#allocation3], %s84
          %s86 = sand.u32 %s20, 1
          %s87 = smul.addr %s86, 64
          %s88 = scalar_lea.vmem [#allocation2], %s87
          %s89 = smul.u32 4, %s10
          %91 = vsyncadd %s85, 0
          %s92 = smul.addr %s89, 2
          %s93 = smul.addr %s92, 8
          %s94 = scalar_lea.hbm %s0, %s93
          %s95 = sshll.u32 %s94, 4
          %s96 = int_to_ptr.hbm [resolvable:$true] %s95
          %s97 = sshll.u32 %s88, 4
          %s98 = int_to_ptr.vmem [resolvable:$true] %s97
          %103 = dma.hbm_to_vmem [thread:$0]  %s96, 1024, %s98, %s85, 128, 128, 8
        $region20: #{tpu_custom_call.1} parent=15 // pred_fallthru
          _
      $region16: #{tpu_custom_call.1} parent=5 // pred_fallthru
        _
      %p104 = scmp.le.s32.totalorder 1, %s10
      %p105 = scmp.lt.s32.totalorder %s10, 3
      %p106 = pnand %p104, %p105
      %p107 = pneg %p106
      // Predicated region
      $region21: #{tpu_custom_call.1} parent=5 // pred_check
        _
      $region22: #{tpu_custom_call.1} parent=5 // pred_check_branch
        %109 = sbr.rel (%p106) target = $region24
      $region23: #{tpu_custom_call.1} parent=5 // pred_region
        %s110 = ssub.s32 %s10, 1
        %s111 = sand.u32 %s23, 1
        %s112 = scalar_lea.sflag [#allocation3], %s111
        %s113 = sand.u32 %s23, 1
        %s114 = smul.addr %s113, 64
        %s115 = scalar_lea.vmem [#allocation2], %s114
        // Predicated region
        $region25: #{tpu_custom_call.1} parent=23 // pred_check
          %p116 = pneg %p36
        $region26: #{tpu_custom_call.1} parent=23 // pred_check_branch
          %118 = sbr.rel (%p116) target = $region28
        $region27: #{tpu_custom_call.1} parent=23 // pred_region
          %120 = dma.done %s112, 1024
        $region28: #{tpu_custom_call.1} parent=23 // pred_fallthru
          _
        %s121 = sand.u32 %s23, 1
        %s122 = scalar_lea.sflag [#allocation3], %s121
        %s123 = sand.u32 %s23, 1
        %s124 = smul.addr %s123, 64
        %s125 = scalar_lea.vmem [#allocation2], %s124
        %p126 = pneg %p36
        %p127 = pneg %p33
        %p128 = pneg %p62
        %p129 = pneg %p59
        %s130 = smul.u32 4, %s15
        %p131 = scmp.lt.s32.totalorder %s130, 7
        %s132 = scalar_select %p131, %s130, 7
        %s133 = smul.addr %s132, 2
        %s134 = smul.addr %s133, 8
        %s135 = scalar_lea.vmem %s1, %s134
        %s136 = smul.u32 4, %s15
        %s137 = smul.u32 4, %s15
        %p138 = scmp.lt.s32.totalorder %s137, 7
        %s139 = scalar_select %p138, %s137, 7
        %s140 = smul.addr %s139, 2
        %s141 = smul.addr %s140, 8
        %s142 = scalar_lea.vmem %s1, %s141
        %s143 = smul.u32 4, %s15
        %v144 = vld [vmem:[%s115 + $0x3] sm:$0xff]
        %v145 = vld [vmem:[%s115 + $0xb] sm:$0xf]
        %v146 = vld [vmem:[%s115 + $0x13] sm:$0xff]
        %v147 = vld [vmem:[%s115 + $0x1b] sm:$0xf]
        %v148 = vld [vmem:[%s115 + $0x23] sm:$0xff]
        %v149 = vld [vmem:[%s115 + $0x2b] sm:$0xf]
        %v150 = vld [vmem:[%s115 + $0x33] sm:$0xff]
        %v151 = vld [vmem:[%s115 + $0x3b] sm:$0xf]
        %160 = vrot.lane.b32.xlu0 %v144, 127
        %v161 = vpop.permute.xlu0 %160
        %162 = vrot.lane.b32.xlu0 %v145, 127
        %v163 = vpop.permute.xlu0 %162
        %164 = vrot.lane.b32.xlu0 %v146, 127
        %v165 = vpop.permute.xlu0 %164
        %166 = vrot.lane.b32.xlu0 %v147, 127
        %v167 = vpop.permute.xlu0 %166
        %168 = vrot.lane.b32.xlu0 %v148, 127
        %v169 = vpop.permute.xlu0 %168
        %170 = vrot.lane.b32.xlu0 %v149, 127
        %v171 = vpop.permute.xlu0 %170
        %172 = vrot.lane.b32.xlu0 %v150, 127
        %v173 = vpop.permute.xlu0 %172
        %174 = vrot.lane.b32.xlu0 %v151, 127
        %v175 = vpop.permute.xlu0 %174
        %vm184 = vcmask 105472
        %185 = vst.msk [vmem:[%s142] sm:$0xff] %vm184, %v161
        %vm186 = vcmask 101376
        %187 = vst.msk [vmem:[%s142 + $0x8] sm:$0xf] %vm186, %v163
        %188 = vst.msk [vmem:[%s142 + $0x10] sm:$0xff] %vm184, %v165
        %189 = vst.msk [vmem:[%s142 + $0x18] sm:$0xf] %vm186, %v167
        %190 = vst.msk [vmem:[%s142 + $0x20] sm:$0xff] %vm184, %v169
        %191 = vst.msk [vmem:[%s142 + $0x28] sm:$0xf] %vm186, %v171
        %192 = vst.msk [vmem:[%s142 + $0x30] sm:$0xff] %vm184, %v173
        %193 = vst.msk [vmem:[%s142 + $0x38] sm:$0xf] %vm186, %v175
        %s194 = smul.u32 4, %s15
        %p195 = scmp.lt.s32.totalorder %s194, 7
        %s196 = scalar_select %p195, %s194, 7
        %s197 = smul.addr %s196, 2
        %s198 = smul.addr %s197, 8
        %s199 = scalar_lea.vmem %s1, %s198
        // Predicated region
        $region29: #{tpu_custom_call.1} parent=23 // pred_check
          %p200 = pneg %p59
        $region30: #{tpu_custom_call.1} parent=23 // pred_check_branch
          %202 = sbr.rel (%p200) target = $region32
        $region31: #{tpu_custom_call.1} parent=23 // pred_region
          %s203 = smul.u32 4, %s15
        $region32: #{tpu_custom_call.1} parent=23 // pred_fallthru
          _
      $region24: #{tpu_custom_call.1} parent=5 // pred_fallthru
        _
      %p204 = scmp.le.s32.totalorder 2, %s10
      // Predicated region
      $region33: #{tpu_custom_call.1} parent=5 // pred_check
        %p205 = pneg %p204
      $region34: #{tpu_custom_call.1} parent=5 // pred_check_branch
        %207 = sbr.rel (%p205) target = $region36
      $region35: #{tpu_custom_call.1} parent=5 // pred_region
        %s208 = ssub.s32 %s10, 2
        // Predicated region
        $region37: #{tpu_custom_call.1} parent=35 // pred_check
          %p209 = pneg %p65
        $region38: #{tpu_custom_call.1} parent=35 // pred_check_branch
          %211 = sbr.rel (%p209) target = $region40
        $region39: #{tpu_custom_call.1} parent=35 // pred_region
          %s212 = smul.u32 4, %s16
          %p213 = scmp.lt.s32.totalorder %s212, 7
          %s214 = scalar_select %p213, %s212, 7
          %s215 = smul.addr %s214, 2
          %s216 = smul.addr %s215, 8
          %s217 = scalar_lea.vmem %s1, %s216
        $region40: #{tpu_custom_call.1} parent=35 // pred_fallthru
          _
      $region36: #{tpu_custom_call.1} parent=5 // pred_fallthru
        _
    $region6: #{tpu_custom_call.1} parent=1 // loop_footer
      %s14 = sadd.s32 1, %s10
    $region7: #{tpu_custom_call.1} parent=1 // loop_footer_branch
      %9 = sbr.rel target = $region3
    $region8: #{tpu_custom_call.1} parent=1 // loop_exit
      _
    %218 = vsyncpa [#allocation3], 1
    %s219 = scalar_lea.sflag [#allocation3], 1
    %220 = vsyncpa %s219, 1

</llo_original>
